<compile_context>
chip_gen: v7x
topology: tpu7x:2x2x1
jax: 0.10.0
libtpu: 0.0.40
codegen_flags: <defaults>
</compile_context>

<pallas_src>
import functools

import jax
import jax.numpy as jnp
from jax.experimental import pallas as pl
from jax.experimental.pallas import tpu as pltpu


PC_IN_DIM = 20      # dim = 20 (not args.no_rgb)
PN_HIDDEN = 64      # PointNet MLP hidden width stand-in
PC_OUT_DIM = 32     # args.pc_out_dim
VIS_OUT_DIM = 32    # args.vis_out_dim

# Max point-rows per input stream per grid step (keeps double-buffered VMEM use
# comfortably inside v7x's 64 MiB even after (.,128) lane padding).
_MAX_ROWS_PER_BLOCK = 4096


def _choose_obj_blk(n_obj, n_pts):
    """Objects per grid step; keeps block dims (8,128)-legal and VMEM-sized."""
    blk = max(1, _MAX_ROWS_PER_BLOCK // n_pts)
    if blk >= 8:
        blk -= blk % 8            # multiple of 8 -> sublane-aligned blocks
    else:
        blk = 8                   # huge P: take 8 objects minimum
    return min(blk, n_obj)        # == n_obj (full dim) when n_obj is small


# -----------------------------------------------------------------------------
# Fused Pallas kernel: shared point MLP -> per-object max-pool -> folded head
# -----------------------------------------------------------------------------
def _pc_extractor_kernel(cur_ref, prev_ref, w1_ref, b1_ref, w2_ref, b2_ref,
                         wc_ref, wp_ref, bf_ref, o_ref, *, obj_blk, n_pts):
    """cur_ref/prev_ref: [obj_blk*n_pts, Din] (bf16).  o_ref: [obj_blk, VIS_OUT_DIM]."""

    def pointnet_pool(x):
        # shared per-point MLP; bf16 x @ bf16 w1 -> f32 accumulate on the MXU
        h = jnp.dot(x, w1_ref[...], preferred_element_type=jnp.float32) + b1_ref[...]
        h = jnp.maximum(h, 0.0)
        h = jnp.dot(h, w2_ref[...], preferred_element_type=jnp.float32) + b2_ref[...]
        # per-object max-pool over the point axis (view reshape: n_pts % 8 == 0)
        return jnp.max(h.reshape(obj_blk, n_pts, -1), axis=1)        # [obj_blk, pc]

    cur = pointnet_pool(cur_ref[...])
    prev = pointnet_pool(prev_ref[...])

    # folded fusion(concat(cur, prev)) -> proj, weight split so no concat is needed:
    #   y = cur @ Wfold[:pc] + prev @ Wfold[pc:] + bfold
    y = (jnp.dot(cur, wc_ref[...], preferred_element_type=jnp.float32)
         + jnp.dot(prev, wp_ref[...], preferred_element_type=jnp.float32)
         + bf_ref[...])
    o_ref[...] = y.astype(o_ref.dtype)


def point_cloud_extractor_forward(params, points, prev_points,
                                  obj_center, prev_obj_center):
    """points, prev_points: [B, N, P, Din] -> [B, N, VIS_OUT_DIM]."""
    del obj_center, prev_obj_center  # unused by the reference forward
    B, N, P, D = points.shape
    n_obj = B * N

    obj_blk = _choose_obj_blk(n_obj, P)
    rows_blk = obj_blk * P
    grid = (pl.cdiv(n_obj, obj_blk),)

    # Free (view) reshapes + bf16 cast of the big HBM streams.
    cur = points.reshape(n_obj * P, D).astype(jnp.bfloat16)
    prev = prev_points.reshape(n_obj * P, D).astype(jnp.bfloat16)
    w1 = params["pn_w1"].astype(jnp.bfloat16)

    # Fold fusion -> proj (no nonlinearity in between): exact up to fp reassoc.
    w_fold = jnp.dot(params["fuse_w"], params["proj_w"])             # [2*pc, vis]
    b_fold = jnp.dot(params["fuse_b"], params["proj_w"]) + params["proj_b"]
    w_cur = w_fold[:PC_OUT_DIM]
    w_prev = w_fold[PC_OUT_DIM:]

    out = pl.pallas_call(
        functools.partial(_pc_extractor_kernel, obj_blk=obj_blk, n_pts=P),
        out_shape=jax.ShapeDtypeStruct((n_obj, VIS_OUT_DIM), jnp.float32),
        grid=grid,
        in_specs=[
            # point streams: tiled over object chunks (pipelined / double-buffered)
            pl.BlockSpec((rows_blk, D), lambda i: (i, 0)),
            pl.BlockSpec((rows_blk, D), lambda i: (i, 0)),
            # weights / biases: constant blocks, stay VMEM-resident across the grid
            pl.BlockSpec((D, PN_HIDDEN), lambda i: (0, 0)),
            pl.BlockSpec((1, PN_HIDDEN), lambda i: (0, 0)),
            pl.BlockSpec((PN_HIDDEN, PC_OUT_DIM), lambda i: (0, 0)),
            pl.BlockSpec((1, PC_OUT_DIM), lambda i: (0, 0)),
            pl.BlockSpec((PC_OUT_DIM, VIS_OUT_DIM), lambda i: (0, 0)),
            pl.BlockSpec((PC_OUT_DIM, VIS_OUT_DIM), lambda i: (0, 0)),
            pl.BlockSpec((1, VIS_OUT_DIM), lambda i: (0, 0)),
        ],
        out_specs=pl.BlockSpec((obj_blk, VIS_OUT_DIM), lambda i: (i, 0)),
        compiler_params=pltpu.CompilerParams(
            dimension_semantics=("parallel",),        # independent object chunks
            vmem_limit_bytes=48 * 1024 * 1024),       # fits v5e/v6e/v7x budgets
    )(cur, prev,
      w1, params["pn_b1"].reshape(1, PN_HIDDEN),
      params["pn_w2"], params["pn_b2"].reshape(1, PC_OUT_DIM),
      w_cur, w_prev, b_fold.reshape(1, VIS_OUT_DIM))
    return out.reshape(B, N, VIS_OUT_DIM)


# -----------------------------------------------------------------------------
# Pure-JAX reference (unfused, unfolded) for a correctness cross-check.
# Mirrors the kernel's bf16 cast of the point streams / first weight so the
# only remaining differences are accumulation order + the exact head fold.
# -----------------------------------------------------------------------------
def reference_forward(params, points, prev_points):
    hp = functools.partial(jnp.dot, precision=jax.lax.Precision.HIGHEST)
    w1 = params["pn_w1"].astype(jnp.bfloat16).astype(jnp.float32)

    def pointnet(pts):
        b, n, p, d = pts.shape
        h = pts.astype(jnp.bfloat16).astype(jnp.float32).reshape(b * n * p, d)
        h = jnp.maximum(hp(h, w1) + params["pn_b1"], 0.0)
        h = hp(h, params["pn_w2"]) + params["pn_b2"]
        return jnp.max(h.reshape(b, n, p, -1), axis=2)

    cur = pointnet(points)
    prev = pointnet(prev_points)
    feat = jnp.concatenate([cur, prev], axis=2)
    feat = hp(feat, params["fuse_w"]) + params["fuse_b"]
    feat = hp(feat, params["proj_w"]) + params["proj_b"]
    return feat


# -----------------------------------------------------------------------------
# Parameters
# -----------------------------------------------------------------------------
def build_params(key):
    def lin(k, din, dout):
        kw, kb = jax.random.split(k)
        return (0.05 * jax.random.normal(kw, (din, dout), jnp.float32),
                0.05 * jax.random.normal(kb, (dout,), jnp.float32))

    keys = jax.random.split(key, 4)
    p = {}
    p["pn_w1"], p["pn_b1"] = lin(keys[0], PC_IN_DIM, PN_HIDDEN)          # PointNet stand-in
    p["pn_w2"], p["pn_b2"] = lin(keys[1], PN_HIDDEN, PC_OUT_DIM)
    p["fuse_w"], p["fuse_b"] = lin(keys[2], 2 * PC_OUT_DIM, PC_OUT_DIM)  # self.fusion
    p["proj_w"], p["proj_b"] = lin(keys[3], PC_OUT_DIM, VIS_OUT_DIM)     # self.proj
    return p


# -----------------------------------------------------------------------------
# Main
# -----------------------------------------------------------------------------
if __name__ == "__main__":
    key = jax.random.PRNGKey(0)
    k_par, k_pts, k_ppts, k_c1, k_c2 = jax.random.split(key, 5)

    B, N_OBJ, P_PTS = 2, 4, 16
    params = build_params(k_par)

    points = jax.random.normal(k_pts, (B, N_OBJ, P_PTS, PC_IN_DIM), jnp.float32)
    prev_points = jax.random.normal(k_ppts, (B, N_OBJ, P_PTS, PC_IN_DIM), jnp.float32)
    obj_center = jax.random.normal(k_c1, (B, N_OBJ, 3), jnp.float32)       # unused
    prev_obj_center = jax.random.normal(k_c2, (B, N_OBJ, 3), jnp.float32)  # unused

    fwd = jax.jit(point_cloud_extractor_forward)
    out = fwd(params, points, prev_points, obj_center, prev_obj_center)
    jax.block_until_ready(out)

    assert out.shape == (B, N_OBJ, VIS_OUT_DIM) and out.dtype == jnp.float32

    ref = reference_forward(params, points, prev_points)
    max_err = float(jnp.max(jnp.abs(out - ref)))
    assert max_err < 2e-3, f"max abs err {max_err}"
    print("KERNEL_OK")
</pallas_src>

<mosaic_0001>
module attributes {stable_mosaic.version = 11 : i64} {
  func.func @_pc_extractor_kernel(%arg0: i32, %arg1: memref<128x20xbf16, #tpu.memory_space<vmem>>, %arg2: memref<128x20xbf16, #tpu.memory_space<vmem>>, %arg3: memref<20x64xbf16, #tpu.memory_space<vmem>>, %arg4: memref<1x64xf32, #tpu.memory_space<vmem>>, %arg5: memref<64x32xf32, #tpu.memory_space<vmem>>, %arg6: memref<1x32xf32, #tpu.memory_space<vmem>>, %arg7: memref<32x32xf32, #tpu.memory_space<vmem>>, %arg8: memref<32x32xf32, #tpu.memory_space<vmem>>, %arg9: memref<1x32xf32, #tpu.memory_space<vmem>>, %arg10: memref<8x32xf32, #tpu.memory_space<vmem>>) attributes {dimension_semantics = [#tpu.dimension_semantics<parallel>], iteration_bounds = array<i64: 1>, scalar_prefetch = 0 : i64, scratch_operands = 0 : i64, tpu.core_type = #tpu.core_type<tc>, window_params = [{transform_indices = @transform_0, window_bounds = array<i64: 128, 20>}, {transform_indices = @transform_1, window_bounds = array<i64: 128, 20>}, {pipeline_mode = #tpu.pipeline_mode<synchronous>, transform_indices = @transform_2, window_bounds = array<i64: 20, 64>}, {pipeline_mode = #tpu.pipeline_mode<synchronous>, transform_indices = @transform_3, window_bounds = array<i64: 1, 64>}, {pipeline_mode = #tpu.pipeline_mode<synchronous>, transform_indices = @transform_4, window_bounds = array<i64: 64, 32>}, {pipeline_mode = #tpu.pipeline_mode<synchronous>, transform_indices = @transform_5, window_bounds = array<i64: 1, 32>}, {pipeline_mode = #tpu.pipeline_mode<synchronous>, transform_indices = @transform_6, window_bounds = array<i64: 32, 32>}, {pipeline_mode = #tpu.pipeline_mode<synchronous>, transform_indices = @transform_7, window_bounds = array<i64: 32, 32>}, {pipeline_mode = #tpu.pipeline_mode<synchronous>, transform_indices = @transform_8, window_bounds = array<i64: 1, 32>}, {transform_indices = @transform_9, window_bounds = array<i64: 8, 32>}]} {
    %c0 = arith.constant 0 : index
    %c0_0 = arith.constant 0 : index
    %0 = vector.load %arg1[%c0, %c0_0] : memref<128x20xbf16, #tpu.memory_space<vmem>>, vector<128x20xbf16>
    %c0_1 = arith.constant 0 : index
    %c0_2 = arith.constant 0 : index
    %1 = vector.load %arg3[%c0_1, %c0_2] : memref<20x64xbf16, #tpu.memory_space<vmem>>, vector<20x64xbf16>
    %cst = arith.constant dense<0.000000e+00> : vector<128x64xf32>
    %2 = tpu.matmul %0, %1, %cst {dimension_numbers = #tpu.dot_dimension_numbers<[1], [0], [0], [1], [0, 0, 1, 1], [], []>} : vector<128x20xbf16>, vector<20x64xbf16>, vector<128x64xf32> -> vector<128x64xf32>
    %c0_3 = arith.constant 0 : index
    %c0_4 = arith.constant 0 : index
    %3 = vector.load %arg4[%c0_3, %c0_4] : memref<1x64xf32, #tpu.memory_space<vmem>>, vector<1x64xf32>
    %4 = vector.broadcast %3 : vector<1x64xf32> to vector<128x64xf32>
    %5 = arith.addf %2, %4 : vector<128x64xf32>
    %cst_5 = arith.constant 0.000000e+00 : f32
    %6 = vector.broadcast %cst_5 : f32 to vector<128x64xf32>
    %7 = arith.maximumf %5, %6 : vector<128x64xf32>
    %c0_6 = arith.constant 0 : index
    %c0_7 = arith.constant 0 : index
    %8 = vector.load %arg5[%c0_6, %c0_7] : memref<64x32xf32, #tpu.memory_space<vmem>>, vector<64x32xf32>
    %cst_8 = arith.constant dense<0.000000e+00> : vector<128x32xf32>
    %9 = tpu.matmul %7, %8, %cst_8 {dimension_numbers = #tpu.dot_dimension_numbers<[1], [0], [0], [1], [0, 0, 1, 1], [], []>} : vector<128x64xf32>, vector<64x32xf32>, vector<128x32xf32> -> vector<128x32xf32>
    %c0_9 = arith.constant 0 : index
    %c0_10 = arith.constant 0 : index
    %10 = vector.load %arg6[%c0_9, %c0_10] : memref<1x32xf32, #tpu.memory_space<vmem>>, vector<1x32xf32>
    %11 = vector.broadcast %10 : vector<1x32xf32> to vector<128x32xf32>
    %12 = arith.addf %9, %11 : vector<128x32xf32>
    %13 = vector.shape_cast %12 : vector<128x32xf32> to vector<8x16x32xf32>
    %cst_11 = arith.constant dense<0xFF800000> : vector<8x32xf32>
    %14 = vector.multi_reduction <maximumf>, %13, %cst_11 [1] : vector<8x16x32xf32> to vector<8x32xf32>
    %c0_12 = arith.constant 0 : index
    %c0_13 = arith.constant 0 : index
    %15 = vector.load %arg2[%c0_12, %c0_13] : memref<128x20xbf16, #tpu.memory_space<vmem>>, vector<128x20xbf16>
    %c0_14 = arith.constant 0 : index
    %c0_15 = arith.constant 0 : index
    %16 = vector.load %arg3[%c0_14, %c0_15] : memref<20x64xbf16, #tpu.memory_space<vmem>>, vector<20x64xbf16>
    %cst_16 = arith.constant dense<0.000000e+00> : vector<128x64xf32>
    %17 = tpu.matmul %15, %16, %cst_16 {dimension_numbers = #tpu.dot_dimension_numbers<[1], [0], [0], [1], [0, 0, 1, 1], [], []>} : vector<128x20xbf16>, vector<20x64xbf16>, vector<128x64xf32> -> vector<128x64xf32>
    %c0_17 = arith.constant 0 : index
    %c0_18 = arith.constant 0 : index
    %18 = vector.load %arg4[%c0_17, %c0_18] : memref<1x64xf32, #tpu.memory_space<vmem>>, vector<1x64xf32>
    %19 = vector.broadcast %18 : vector<1x64xf32> to vector<128x64xf32>
    %20 = arith.addf %17, %19 : vector<128x64xf32>
    %cst_19 = arith.constant 0.000000e+00 : f32
    %21 = vector.broadcast %cst_19 : f32 to vector<128x64xf32>
    %22 = arith.maximumf %20, %21 : vector<128x64xf32>
    %c0_20 = arith.constant 0 : index
    %c0_21 = arith.constant 0 : index
    %23 = vector.load %arg5[%c0_20, %c0_21] : memref<64x32xf32, #tpu.memory_space<vmem>>, vector<64x32xf32>
    %cst_22 = arith.constant dense<0.000000e+00> : vector<128x32xf32>
    %24 = tpu.matmul %22, %23, %cst_22 {dimension_numbers = #tpu.dot_dimension_numbers<[1], [0], [0], [1], [0, 0, 1, 1], [], []>} : vector<128x64xf32>, vector<64x32xf32>, vector<128x32xf32> -> vector<128x32xf32>
    %c0_23 = arith.constant 0 : index
    %c0_24 = arith.constant 0 : index
    %25 = vector.load %arg6[%c0_23, %c0_24] : memref<1x32xf32, #tpu.memory_space<vmem>>, vector<1x32xf32>
    %26 = vector.broadcast %25 : vector<1x32xf32> to vector<128x32xf32>
    %27 = arith.addf %24, %26 : vector<128x32xf32>
    %28 = vector.shape_cast %27 : vector<128x32xf32> to vector<8x16x32xf32>
    %cst_25 = arith.constant dense<0xFF800000> : vector<8x32xf32>
    %29 = vector.multi_reduction <maximumf>, %28, %cst_25 [1] : vector<8x16x32xf32> to vector<8x32xf32>
    %c0_26 = arith.constant 0 : index
    %c0_27 = arith.constant 0 : index
    %30 = vector.load %arg7[%c0_26, %c0_27] : memref<32x32xf32, #tpu.memory_space<vmem>>, vector<32x32xf32>
    %cst_28 = arith.constant dense<0.000000e+00> : vector<8x32xf32>
    %31 = tpu.matmul %14, %30, %cst_28 {dimension_numbers = #tpu.dot_dimension_numbers<[1], [0], [0], [1], [0, 0, 1, 1], [], []>} : vector<8x32xf32>, vector<32x32xf32>, vector<8x32xf32> -> vector<8x32xf32>
    %c0_29 = arith.constant 0 : index
    %c0_30 = arith.constant 0 : index
    %32 = vector.load %arg8[%c0_29, %c0_30] : memref<32x32xf32, #tpu.memory_space<vmem>>, vector<32x32xf32>
    %cst_31 = arith.constant dense<0.000000e+00> : vector<8x32xf32>
    %33 = tpu.matmul %29, %32, %cst_31 {dimension_numbers = #tpu.dot_dimension_numbers<[1], [0], [0], [1], [0, 0, 1, 1], [], []>} : vector<8x32xf32>, vector<32x32xf32>, vector<8x32xf32> -> vector<8x32xf32>
    %34 = arith.addf %31, %33 : vector<8x32xf32>
    %c0_32 = arith.constant 0 : index
    %c0_33 = arith.constant 0 : index
    %35 = vector.load %arg9[%c0_32, %c0_33] : memref<1x32xf32, #tpu.memory_space<vmem>>, vector<1x32xf32>
    %36 = vector.broadcast %35 : vector<1x32xf32> to vector<8x32xf32>
    %37 = arith.addf %34, %36 : vector<8x32xf32>
    %c0_34 = arith.constant 0 : index
    %c0_35 = arith.constant 0 : index
    %38 = vector.load %arg10[%c0_34, %c0_35] : memref<8x32xf32, #tpu.memory_space<vmem>>, vector<8x32xf32>
    tpu.vector_store %arg10[%c0_34, %c0_35], %37 {strides = array<i32>} : memref<8x32xf32, #tpu.memory_space<vmem>>, vector<8x32xf32>,
    return
  }
  func.func @transform_0(%arg0: i32) -> (i32, i32) {
    %c0_i32 = arith.constant 0 : i32
    %c0_i32_0 = arith.constant 0 : i32
    return %arg0, %c0_i32 : i32, i32
  }
  func.func @transform_1(%arg0: i32) -> (i32, i32) {
    %c0_i32 = arith.constant 0 : i32
    %c0_i32_0 = arith.constant 0 : i32
    return %arg0, %c0_i32 : i32, i32
  }
  func.func @transform_2(%arg0: i32) -> (i32, i32) {
    %c0_i32 = arith.constant 0 : i32
    %c0_i32_0 = arith.constant 0 : i32
    %c0_i32_1 = arith.constant 0 : i32
    return %c0_i32, %c0_i32_0 : i32, i32
  }
  func.func @transform_3(%arg0: i32) -> (i32, i32) {
    %c0_i32 = arith.constant 0 : i32
    %c0_i32_0 = arith.constant 0 : i32
    %c0_i32_1 = arith.constant 0 : i32
    return %c0_i32, %c0_i32_0 : i32, i32
  }
  func.func @transform_4(%arg0: i32) -> (i32, i32) {
    %c0_i32 = arith.constant 0 : i32
    %c0_i32_0 = arith.constant 0 : i32
    %c0_i32_1 = arith.constant 0 : i32
    return %c0_i32, %c0_i32_0 : i32, i32
  }
  func.func @transform_5(%arg0: i32) -> (i32, i32) {
    %c0_i32 = arith.constant 0 : i32
    %c0_i32_0 = arith.constant 0 : i32
    %c0_i32_1 = arith.constant 0 : i32
    return %c0_i32, %c0_i32_0 : i32, i32
  }
  func.func @transform_6(%arg0: i32) -> (i32, i32) {
    %c0_i32 = arith.constant 0 : i32
    %c0_i32_0 = arith.constant 0 : i32
    %c0_i32_1 = arith.constant 0 : i32
    return %c0_i32, %c0_i32_0 : i32, i32
  }
  func.func @transform_7(%arg0: i32) -> (i32, i32) {
    %c0_i32 = arith.constant 0 : i32
    %c0_i32_0 = arith.constant 0 : i32
    %c0_i32_1 = arith.constant 0 : i32
    return %c0_i32, %c0_i32_0 : i32, i32
  }
  func.func @transform_8(%arg0: i32) -> (i32, i32) {
    %c0_i32 = arith.constant 0 : i32
    %c0_i32_0 = arith.constant 0 : i32
    %c0_i32_1 = arith.constant 0 : i32
    return %c0_i32, %c0_i32_0 : i32, i32
  }
  func.func @transform_9(%arg0: i32) -> (i32, i32) {
    %c0_i32 = arith.constant 0 : i32
    %c0_i32_0 = arith.constant 0 : i32
    return %arg0, %c0_i32 : i32, i32
  }
}

</mosaic_0001>

<llo_original>
// kernel: point_cloud_extractor_forward.1
$region0: #{point_cloud_extractor_forward.1}
  #allocation0 [shape = 'u32[]', space=smem, size = 0x4, offset = 0x4, fixed_abs, tag = 'smem constant byte address 0x4 - core index']
  #allocation1 [shape = 'u32[144,128]{1,0:T(1,128)}', space=vmem, size = 0x12000, scoped, tag = 'internal scratch']
  %s0 = inlined_call_operand.vmem [shape: bf16[128,20], index: 0, kind: input, shape index: {}]
  %s1 = inlined_call_operand.vmem [shape: bf16[128,20], index: 1, kind: input, shape index: {}]
  %s2 = inlined_call_operand.vmem [shape: bf16[20,64], index: 2, kind: input, shape index: {}]
  %s3 = inlined_call_operand.vmem [shape: f32[1,64], index: 3, kind: input, shape index: {}]
  %s4 = inlined_call_operand.vmem [shape: f32[64,32], index: 4, kind: input, shape index: {}]
  %s5 = inlined_call_operand.vmem [shape: f32[1,32], index: 5, kind: input, shape index: {}]
  %s6 = inlined_call_operand.vmem [shape: f32[32,32], index: 6, kind: input, shape index: {}]
  %s7 = inlined_call_operand.vmem [shape: f32[32,32], index: 7, kind: input, shape index: {}]
  %s8 = inlined_call_operand.vmem [shape: f32[1,32], index: 8, kind: input, shape index: {}]
  %s9 = inlined_call_operand.hbm [shape: f32[8,32], index: 9, kind: output, shape index: {}]
  %s10 = sld [smem:[#allocation0]]
  $region46: #{point_cloud_extractor_forward.1} parent=0
    _
  %s12 = ssub.s32 1, %s10
  %s13 = scalar_select 0, %s12, %s10
  $region1: #{point_cloud_extractor_forward.1} parent=0
    #allocation2 [shape = 'u8[4096]{0}', space=vmem, size = 0x1000, scoped, tag = 'output window, operand 0, single buffered']
    #allocation3 [shape = 's32[1]{0}', space=sflag, size = 0x4, scoped, tag = 'scoped memory for point_cloud_extractor_forward.1']
    %14 = vsyncpa [#allocation3], 0
    // Predicated region
    $region2: #{point_cloud_extractor_forward.1} parent=1 // pred_check
      _
    $region3: #{point_cloud_extractor_forward.1} parent=1 // pred_check_branch
      %16 = sbr.rel (0) target = $region5
    $region4: #{point_cloud_extractor_forward.1} parent=1 // pred_region
      _
    $region5: #{point_cloud_extractor_forward.1} parent=1 // pred_fallthru
      _
    // Predicated region
    $region6: #{point_cloud_extractor_forward.1} parent=1 // pred_check
      _
    $region7: #{point_cloud_extractor_forward.1} parent=1 // pred_check_branch
      %18 = sbr.rel (0) target = $region9
    $region8: #{point_cloud_extractor_forward.1} parent=1 // pred_region
      _
    $region9: #{point_cloud_extractor_forward.1} parent=1 // pred_fallthru
      _
    // Predicated region
    $region10: #{point_cloud_extractor_forward.1} parent=1 // pred_check
      _
    $region11: #{point_cloud_extractor_forward.1} parent=1 // pred_check_branch
      %20 = sbr.rel (0) target = $region13
    $region12: #{point_cloud_extractor_forward.1} parent=1 // pred_region
      _
    $region13: #{point_cloud_extractor_forward.1} parent=1 // pred_fallthru
      _
    // Predicated region
    $region14: #{point_cloud_extractor_forward.1} parent=1 // pred_check
      _
    $region15: #{point_cloud_extractor_forward.1} parent=1 // pred_check_branch
      %22 = sbr.rel (0) target = $region17
    $region16: #{point_cloud_extractor_forward.1} parent=1 // pred_region
      _
    $region17: #{point_cloud_extractor_forward.1} parent=1 // pred_fallthru
      _
    // Predicated region
    $region18: #{point_cloud_extractor_forward.1} parent=1 // pred_check
      _
    $region19: #{point_cloud_extractor_forward.1} parent=1 // pred_check_branch
      %24 = sbr.rel (0) target = $region21
    $region20: #{point_cloud_extractor_forward.1} parent=1 // pred_region
      _
    $region21: #{point_cloud_extractor_forward.1} parent=1 // pred_fallthru
      _
    // Predicated region
    $region22: #{point_cloud_extractor_forward.1} parent=1 // pred_check
      _
    $region23: #{point_cloud_extractor_forward.1} parent=1 // pred_check_branch
      %26 = sbr.rel (0) target = $region25
    $region24: #{point_cloud_extractor_forward.1} parent=1 // pred_region
      _
    $region25: #{point_cloud_extractor_forward.1} parent=1 // pred_fallthru
      _
    // Predicated region
    $region26: #{point_cloud_extractor_forward.1} parent=1 // pred_check
      _
    $region27: #{point_cloud_extractor_forward.1} parent=1 // pred_check_branch
      %28 = sbr.rel (0) target = $region29
    $region28: #{point_cloud_extractor_forward.1} parent=1 // pred_region
      _
    $region29: #{point_cloud_extractor_forward.1} parent=1 // pred_fallthru
      _
    // Predicated region
    $region30: #{point_cloud_extractor_forward.1} parent=1 // pred_check
      _
    $region31: #{point_cloud_extractor_forward.1} parent=1 // pred_check_branch
      %30 = sbr.rel (0) target = $region33
    $region32: #{point_cloud_extractor_forward.1} parent=1 // pred_region
      _
    $region33: #{point_cloud_extractor_forward.1} parent=1 // pred_fallthru
      _
    // Predicated region
    $region34: #{point_cloud_extractor_forward.1} parent=1 // pred_check
      _
    $region35: #{point_cloud_extractor_forward.1} parent=1 // pred_check_branch
      %32 = sbr.rel (0) target = $region37
    $region36: #{point_cloud_extractor_forward.1} parent=1 // pred_region
      _
    $region37: #{point_cloud_extractor_forward.1} parent=1 // pred_fallthru
      _
    %v34 = vld [vmem:[%s0] sm:$0xf]
    %v35 = vld [vmem:[%s0 + $0x4] sm:$0xf]
    %v36 = vld [vmem:[%s0 + $0x8] sm:$0xf]
    %v37 = vld [vmem:[%s0 + $0xc] sm:$0xf]
    %v38 = vld [vmem:[%s0 + $0x10] sm:$0xf]
    %v39 = vld [vmem:[%s0 + $0x14] sm:$0xf]
    %v40 = vld [vmem:[%s0 + $0x18] sm:$0xf]
    %v41 = vld [vmem:[%s0 + $0x1c] sm:$0xf]
    %v42 = vld [vmem:[%s0 + $0x20] sm:$0xf]
    %v43 = vld [vmem:[%s0 + $0x24] sm:$0xf]
    %v44 = vld [vmem:[%s0 + $0x28] sm:$0xf]
    %v45 = vld [vmem:[%s0 + $0x2c] sm:$0xf]
    %v46 = vld [vmem:[%s0 + $0x30] sm:$0xf]
    %v47 = vld [vmem:[%s0 + $0x34] sm:$0xf]
    %v48 = vld [vmem:[%s0 + $0x38] sm:$0xf]
    %v49 = vld [vmem:[%s0 + $0x3c] sm:$0xf]
    %v50 = vld [vmem:[%s2] sm:$0xf]
    %v51 = vld [vmem:[%s2 + $0x4] sm:$0xf]
    %v52 = vld [vmem:[%s2 + $0x8] sm:$0x3]
    %v53 = vld [vmem:[%s3] sm:$0x1]
    %v55 = vlaneseq
    %v56 = vshrl.u32 %v55, 7
    %v57 = vsub.s32 0, %v56
    %v58 = vrot.slane %v53, %v57
    %v76 = vunpack.c.l.b16 %v34
    %v77 = vunpack.c.l.b16 %v35
    %v78 = vunpack.c.l.b16 %v36
    %v79 = vunpack.c.l.b16 %v37
    %v80 = vunpack.c.l.b16 %v38
    %v81 = vunpack.c.l.b16 %v39
    %v82 = vunpack.c.l.b16 %v40
    %v83 = vunpack.c.l.b16 %v41
    %v84 = vunpack.c.l.b16 %v42
    %v85 = vunpack.c.l.b16 %v43
    %v86 = vunpack.c.l.b16 %v44
    %v87 = vunpack.c.l.b16 %v45
    %v88 = vunpack.c.l.b16 %v46
    %v89 = vunpack.c.l.b16 %v47
    %v90 = vunpack.c.l.b16 %v48
    %v91 = vunpack.c.l.b16 %v49
    %v92 = vpack.c.b16 %v77, %v76
    %v93 = vpack.c.b16 %v79, %v78
    %v94 = vpack.c.b16 %v81, %v80
    %v95 = vpack.c.b16 %v83, %v82
    %v96 = vpack.c.b16 %v85, %v84
    %v97 = vpack.c.b16 %v87, %v86
    %v98 = vpack.c.b16 %v89, %v88
    %v99 = vpack.c.b16 %v91, %v90
    %v103 = vunpack.c.l.b16 %v50
    %v104 = vunpack.c.l.b16 %v51
    %v105 = vunpack.c.l.b16 %v52
    %v106 = vpack.c.b16 %v104, %v103
    %v107 = vpack.c.b16 %v105, %v105
    %vm109 = vcmask 162816
    %v111 = vsel %vm109, %v92, 0
    %v114 = vsel %vm109, %v93, 0
    %v117 = vsel %vm109, %v94, 0
    %v120 = vsel %vm109, %v95, 0
    %v123 = vsel %vm109, %v96, 0
    %v126 = vsel %vm109, %v97, 0
    %v129 = vsel %vm109, %v98, 0
    %v132 = vsel %vm109, %v99, 0
    %vm134 = vcmask 1041408
    %v136 = vsel %vm134, %v107, 0
    %138 = vmatprep.subr.bf16.mxu0 0
    %139 = vmatpush1.bf16.msra.mxu0 %v106
    %140 = vmatprep.subr.bf16.mxu0 0
    %141 = vmatpush1.bf16.msra.mxu0 %v136
    %142 = vmatprep.subr.bf16.mxu0 0
    %143 = vmatpush1.bf16.msra.mxu0 0
    %144 = vmatprep.subr.bf16.mxu0 0
    %145 = vmatpush1.bf16.msra.mxu0 0
    %146 = vmatprep.subr.bf16.mxu0 0
    %147 = vmatpush1.bf16.msra.mxu0 0
    %148 = vmatprep.subr.bf16.mxu0 0
    %149 = vmatpush1.bf16.msra.mxu0 0
    %150 = vmatprep.subr.bf16.mxu0 0
    %151 = vmatpush1.bf16.msra.mxu0 0
    %152 = vmatprep.subr.bf16.mxu0 0
    %153 = vmatpush1.bf16.msra.mxu0 0
    %154 = vmatprep.subr.bf16.mxu0 0
    %155 = vmatpush1.bf16.msra.mxu0 0
    %156 = vmatprep.subr.bf16.mxu0 0
    %157 = vmatpush1.bf16.msra.mxu0 0
    %158 = vmatprep.subr.bf16.mxu0 0
    %159 = vmatpush1.bf16.msra.mxu0 0
    %160 = vmatprep.subr.bf16.mxu0 0
    %161 = vmatpush1.bf16.msra.mxu0 0
    %162 = vmatprep.subr.bf16.mxu0 0
    %163 = vmatpush1.bf16.msra.mxu0 0
    %164 = vmatprep.subr.bf16.mxu0 0
    %165 = vmatpush1.bf16.msra.mxu0 0
    %166 = vmatprep.subr.bf16.mxu0 0
    %167 = vmatpush1.bf16.msra.mxu0 0
    %168 = vmatprep.subr.bf16.mxu0 0
    %169 = vmatpush1.bf16.msra.mxu0 0
    %170 = vmatprep.mubr.bf16.mxu0 0
    %171 = vmatmul.mubr.bf16.gmra.mrb[0].mxu0 %v111
    %v172 = vpop.f32.mrb[0].mxu0
    %v173 = vadd.f32 %v58, %v172
    %v174 = vpop.f32.mrb[0].mxu0
    %v175 = vpop.f32.mrb[0].mxu0
    %v176 = vadd.f32 %v58, %v175
    %v177 = vpop.f32.mrb[0].mxu0
    %178 = vmatprep.mubr.bf16.mxu0 0
    %179 = vmatmul.mubr.bf16.gmra.mrb[0].mxu0 %v114
    %v180 = vpop.f32.mrb[0].mxu0
    %v181 = vadd.f32 %v58, %v180
    %v182 = vpop.f32.mrb[0].mxu0
    %v183 = vpop.f32.mrb[0].mxu0
    %v184 = vadd.f32 %v58, %v183
    %v185 = vpop.f32.mrb[0].mxu0
    %186 = vmatprep.mubr.bf16.mxu0 0
    %187 = vmatmul.mubr.bf16.gmra.mrb[0].mxu0 %v117
    %v188 = vpop.f32.mrb[0].mxu0
    %v189 = vadd.f32 %v58, %v188
    %v190 = vpop.f32.mrb[0].mxu0
    %v191 = vpop.f32.mrb[0].mxu0
    %v192 = vadd.f32 %v58, %v191
    %v193 = vpop.f32.mrb[0].mxu0
    %194 = vmatprep.mubr.bf16.mxu0 0
    %195 = vmatmul.mubr.bf16.gmra.mrb[0].mxu0 %v120
    %v196 = vpop.f32.mrb[0].mxu0
    %v197 = vadd.f32 %v58, %v196
    %v198 = vpop.f32.mrb[0].mxu0
    %v199 = vpop.f32.mrb[0].mxu0
    %v200 = vadd.f32 %v58, %v199
    %v201 = vpop.f32.mrb[0].mxu0
    %202 = vmatprep.mubr.bf16.mxu0 0
    %203 = vmatmul.mubr.bf16.gmra.mrb[0].mxu0 %v123
    %v204 = vpop.f32.mrb[0].mxu0
    %v205 = vadd.f32 %v58, %v204
    %v206 = vpop.f32.mrb[0].mxu0
    %v207 = vpop.f32.mrb[0].mxu0
    %v208 = vadd.f32 %v58, %v207
    %v209 = vpop.f32.mrb[0].mxu0
    %210 = vmatprep.mubr.bf16.mxu0 0
    %211 = vmatmul.mubr.bf16.gmra.mrb[0].mxu0 %v126
    %v212 = vpop.f32.mrb[0].mxu0
    %v213 = vadd.f32 %v58, %v212
    %v214 = vpop.f32.mrb[0].mxu0
    %v215 = vpop.f32.mrb[0].mxu0
    %v216 = vadd.f32 %v58, %v215
    %v217 = vpop.f32.mrb[0].mxu0
    %218 = vmatprep.mubr.bf16.mxu0 0
    %219 = vmatmul.mubr.bf16.gmra.mrb[0].mxu0 %v129
    %v220 = vpop.f32.mrb[0].mxu0
    %v221 = vadd.f32 %v58, %v220
    %v222 = vpop.f32.mrb[0].mxu0
    %v223 = vpop.f32.mrb[0].mxu0
    %v224 = vadd.f32 %v58, %v223
    %v225 = vpop.f32.mrb[0].mxu0
    %226 = vmatprep.mubr.bf16.mxu0 0
    %227 = vmatmul.mubr.bf16.gmra.mrb[0].mxu0 %v132
    %v228 = vpop.f32.mrb[0].mxu0
    %v229 = vadd.f32 %v58, %v228
    %v230 = vpop.f32.mrb[0].mxu0
    %v231 = vpop.f32.mrb[0].mxu0
    %v232 = vadd.f32 %v58, %v231
    %v233 = vpop.f32.mrb[0].mxu0
    %234 = vdwg.mxu0
    %v235 = vmax.f32 %v173, 0.0
    %v236 = vmax.f32 %v176, 0.0
    %v237 = vmax.f32 %v181, 0.0
    %v238 = vmax.f32 %v184, 0.0
    %v239 = vmax.f32 %v189, 0.0
    %v240 = vmax.f32 %v192, 0.0
    %v241 = vmax.f32 %v197, 0.0
    %v242 = vmax.f32 %v200, 0.0
    %v243 = vmax.f32 %v205, 0.0
    %v244 = vmax.f32 %v208, 0.0
    %v245 = vmax.f32 %v213, 0.0
    %v246 = vmax.f32 %v216, 0.0
    %v247 = vmax.f32 %v221, 0.0
    %v248 = vmax.f32 %v224, 0.0
    %v249 = vmax.f32 %v229, 0.0
    %v250 = vmax.f32 %v232, 0.0
    %v251 = vld [vmem:[%s4] sm:$0xff]
    %v252 = vld [vmem:[%s4 + $0x8] sm:$0xff]
    %v253 = vld [vmem:[%s4 + $0x10] sm:$0xff]
    %v254 = vld [vmem:[%s4 + $0x18] sm:$0xff]
    %v255 = vld [vmem:[%s4 + $0x20] sm:$0xff]
    %v256 = vld [vmem:[%s4 + $0x28] sm:$0xff]
    %v257 = vld [vmem:[%s4 + $0x30] sm:$0xff]
    %v258 = vld [vmem:[%s4 + $0x38] sm:$0xff]
    %v259 = vld [vmem:[%s5] sm:$0x1]
    %v261 = vlaneseq
    %v262 = vshrl.u32 %v261, 7
    %v263 = vsub.s32 0, %v262
    %v264 = vrot.slane %v259, %v263
    %vm266 = vcmask 523264
    %v268 = vsel %vm266, %v235, 0
    %v271 = vsel %vm266, %v236, 0
    %v274 = vsel %vm266, %v237, 0
    %v277 = vsel %vm266, %v238, 0
    %v280 = vsel %vm266, %v239, 0
    %v283 = vsel %vm266, %v240, 0
    %v286 = vsel %vm266, %v241, 0
    %v289 = vsel %vm266, %v242, 0
    %v292 = vsel %vm266, %v243, 0
    %v295 = vsel %vm266, %v244, 0
    %v298 = vsel %vm266, %v245, 0
    %v301 = vsel %vm266, %v246, 0
    %v304 = vsel %vm266, %v247, 0
    %v307 = vsel %vm266, %v248, 0
    %v310 = vsel %vm266, %v249, 0
    %v313 = vsel %vm266, %v250, 0
    %315 = vmatprep.subr.mxu0 0.0
    %316 = vmatpush1.msra.mxu0 %v251
    %317 = vmatprep.subr.mxu0 0.0
    %318 = vmatpush1.msra.mxu0 %v252
    %319 = vmatprep.subr.mxu0 0.0
    %320 = vmatpush1.msra.mxu0 %v253
    %321 = vmatprep.subr.mxu0 0.0
    %322 = vmatpush1.msra.mxu0 %v254
    %323 = vmatprep.subr.mxu0 0.0
    %324 = vmatpush1.msra.mxu0 %v255
    %325 = vmatprep.subr.mxu0 0.0
    %326 = vmatpush1.msra.mxu0 %v256
    %327 = vmatprep.subr.mxu0 0.0
    %328 = vmatpush1.msra.mxu0 %v257
    %329 = vmatprep.subr.mxu0 0.0
    %330 = vmatpush1.msra.mxu0 %v258
    %331 = vmatprep.subr.mxu0 0.0
    %332 = vmatpush1.msra.mxu0 0.0
    %333 = vmatprep.subr.mxu0 0.0
    %334 = vmatpush1.msra.mxu0 0.0
    %335 = vmatprep.subr.mxu0 0.0
    %336 = vmatpush1.msra.mxu0 0.0
    %337 = vmatprep.subr.mxu0 0.0
    %338 = vmatpush1.msra.mxu0 0.0
    %339 = vmatprep.subr.mxu0 0.0
    %340 = vmatpush1.msra.mxu0 0.0
    %341 = vmatprep.subr.mxu0 0.0
    %342 = vmatpush1.msra.mxu0 0.0
    %343 = vmatprep.subr.mxu0 0.0
    %344 = vmatpush1.msra.mxu0 0.0
    %345 = vmatprep.subr.mxu0 0.0
    %346 = vmatpush1.msra.mxu0 0.0
    %347 = vmatprep.subr.mxu0 0.0
    %348 = vmatpush1.msra.mxu0 0.0
    %349 = vmatprep.subr.mxu0 0.0
    %350 = vmatpush1.msra.mxu0 0.0
    %351 = vmatprep.subr.mxu0 0.0
    %352 = vmatpush1.msra.mxu0 0.0
    %353 = vmatprep.subr.mxu0 0.0
    %354 = vmatpush1.msra.mxu0 0.0
    %355 = vmatprep.subr.mxu0 0.0
    %356 = vmatpush1.msra.mxu0 0.0
    %357 = vmatprep.subr.mxu0 0.0
    %358 = vmatpush1.msra.mxu0 0.0
    %359 = vmatprep.subr.mxu0 0.0
    %360 = vmatpush1.msra.mxu0 0.0
    %361 = vmatprep.subr.mxu0 0.0
    %362 = vmatpush1.msra.mxu0 0.0
    %363 = vmatprep.subr.mxu0 0.0
    %364 = vmatpush1.msra.mxu0 0.0
    %365 = vmatprep.subr.mxu0 0.0
    %366 = vmatpush1.msra.mxu0 0.0
    %367 = vmatprep.subr.mxu0 0.0
    %368 = vmatpush1.msra.mxu0 0.0
    %369 = vmatprep.subr.mxu0 0.0
    %370 = vmatpush1.msra.mxu0 0.0
    %371 = vmatprep.subr.mxu0 0.0
    %372 = vmatpush1.msra.mxu0 0.0
    %373 = vmatprep.subr.mxu0 0.0
    %374 = vmatpush1.msra.mxu0 0.0
    %375 = vmatprep.subr.mxu0 0.0
    %376 = vmatpush1.msra.mxu0 0.0
    %377 = vmatprep.subr.mxu0 0.0
    %378 = vmatpush1.msra.mxu0 0.0
    %379 = vmatprep.mubr.f32.mxu0 0.0
    %380 = vmatmul.mubr.f32.gmra.mrb[0].mxu0 %v268
    %v381 = vpop.f32.mrb[0].mxu0
    %v382 = vadd.f32 %v264, %v381
    %v383 = vpop.f32.mrb[0].mxu0
    %384 = vmatprep.mubr.f32.mxu0 0.0
    %385 = vmatmul.mubr.f32.gmra.mrb[0].mxu0 %v271
    %v386 = vpop.f32.mrb[0].mxu0
    %v387 = vadd.f32 %v264, %v386
    %v388 = vpop.f32.mrb[0].mxu0
    %389 = vmatprep.mubr.f32.mxu0 0.0
    %390 = vmatmul.mubr.f32.gmra.mrb[0].mxu0 %v274
    %v391 = vpop.f32.mrb[0].mxu0
    %v392 = vadd.f32 %v264, %v391
    %v393 = vpop.f32.mrb[0].mxu0
    %394 = vmatprep.mubr.f32.mxu0 0.0
    %395 = vmatmul.mubr.f32.gmra.mrb[0].mxu0 %v277
    %v396 = vpop.f32.mrb[0].mxu0
    %v397 = vadd.f32 %v264, %v396
    %v398 = vpop.f32.mrb[0].mxu0
    %399 = vmatprep.mubr.f32.mxu0 0.0
    %400 = vmatmul.mubr.f32.gmra.mrb[0].mxu0 %v280
    %v401 = vpop.f32.mrb[0].mxu0
    %v402 = vadd.f32 %v264, %v401
    %v403 = vpop.f32.mrb[0].mxu0
    %404 = vmatprep.mubr.f32.mxu0 0.0
    %405 = vmatmul.mubr.f32.gmra.mrb[0].mxu0 %v283
    %v406 = vpop.f32.mrb[0].mxu0
    %v407 = vadd.f32 %v264, %v406
    %v408 = vpop.f32.mrb[0].mxu0
    %409 = vmatprep.mubr.f32.mxu0 0.0
    %410 = vmatmul.mubr.f32.gmra.mrb[0].mxu0 %v286
    %v411 = vpop.f32.mrb[0].mxu0
    %v412 = vadd.f32 %v264, %v411
    %v413 = vpop.f32.mrb[0].mxu0
    %414 = vmatprep.mubr.f32.mxu0 0.0
    %415 = vmatmul.mubr.f32.gmra.mrb[0].mxu0 %v289
    %v416 = vpop.f32.mrb[0].mxu0
    %v417 = vadd.f32 %v264, %v416
    %v418 = vpop.f32.mrb[0].mxu0
    %419 = vmatprep.mubr.f32.mxu0 0.0
    %420 = vmatmul.mubr.f32.gmra.mrb[0].mxu0 %v292
    %v421 = vpop.f32.mrb[0].mxu0
    %v422 = vadd.f32 %v264, %v421
    %v423 = vpop.f32.mrb[0].mxu0
    %424 = vmatprep.mubr.f32.mxu0 0.0
    %425 = vmatmul.mubr.f32.gmra.mrb[0].mxu0 %v295
    %v426 = vpop.f32.mrb[0].mxu0
    %v427 = vadd.f32 %v264, %v426
    %v428 = vpop.f32.mrb[0].mxu0
    %429 = vmatprep.mubr.f32.mxu0 0.0
    %430 = vmatmul.mubr.f32.gmra.mrb[0].mxu0 %v298
    %v431 = vpop.f32.mrb[0].mxu0
    %v432 = vadd.f32 %v264, %v431
    %v433 = vpop.f32.mrb[0].mxu0
    %434 = vmatprep.mubr.f32.mxu0 0.0
    %435 = vmatmul.mubr.f32.gmra.mrb[0].mxu0 %v301
    %v436 = vpop.f32.mrb[0].mxu0
    %v437 = vadd.f32 %v264, %v436
    %v438 = vpop.f32.mrb[0].mxu0
    %439 = vmatprep.mubr.f32.mxu0 0.0
    %440 = vmatmul.mubr.f32.gmra.mrb[0].mxu0 %v304
    %v441 = vpop.f32.mrb[0].mxu0
    %v442 = vadd.f32 %v264, %v441
    %v443 = vpop.f32.mrb[0].mxu0
    %444 = vmatprep.mubr.f32.mxu0 0.0
    %445 = vmatmul.mubr.f32.gmra.mrb[0].mxu0 %v307
    %v446 = vpop.f32.mrb[0].mxu0
    %v447 = vadd.f32 %v264, %v446
    %v448 = vpop.f32.mrb[0].mxu0
    %449 = vmatprep.mubr.f32.mxu0 0.0
    %450 = vmatmul.mubr.f32.gmra.mrb[0].mxu0 %v310
    %v451 = vpop.f32.mrb[0].mxu0
    %v452 = vadd.f32 %v264, %v451
    %v453 = vpop.f32.mrb[0].mxu0
    %454 = vmatprep.mubr.f32.mxu0 0.0
    %455 = vmatmul.mubr.f32.gmra.mrb[0].mxu0 %v313
    %v456 = vpop.f32.mrb[0].mxu0
    %v457 = vadd.f32 %v264, %v456
    %v458 = vpop.f32.mrb[0].mxu0
    %459 = vdwg.mxu0
    %vm460 = vcmask 261120
    %v461 = vsel %vm460, %v382, -inf
    %v462 = vsel %vm460, %v387, -inf
    %v463 = vmax.f32 %v461, %v462
    %v464 = vrot.slane %v463, 4
    %v465 = vmax.f32 %v463, %v464
    %v466 = vrot.slane %v465, 2
    %v467 = vmax.f32 %v465, %v466
    %v468 = vrot.slane %v467, 1
    %v469 = vmax.f32 %v467, %v468
    %v470 = vsel %vm460, %v392, -inf
    %v471 = vsel %vm460, %v397, -inf
    %v472 = vmax.f32 %v470, %v471
    %v473 = vrot.slane %v472, 4
    %v474 = vmax.f32 %v472, %v473
    %v475 = vrot.slane %v474, 2
    %v476 = vmax.f32 %v474, %v475
    %v477 = vrot.slane %v476, 1
    %v478 = vmax.f32 %v476, %v477
    %v479 = vsel %vm460, %v402, -inf
    %v480 = vsel %vm460, %v407, -inf
    %v481 = vmax.f32 %v479, %v480
    %v482 = vrot.slane %v481, 4
    %v483 = vmax.f32 %v481, %v482
    %v484 = vrot.slane %v483, 2
    %v485 = vmax.f32 %v483, %v484
    %v486 = vrot.slane %v485, 1
    %v487 = vmax.f32 %v485, %v486
    %v488 = vsel %vm460, %v412, -inf
    %v489 = vsel %vm460, %v417, -inf
    %v490 = vmax.f32 %v488, %v489
    %v491 = vrot.slane %v490, 4
    %v492 = vmax.f32 %v490, %v491
    %v493 = vrot.slane %v492, 2
    %v494 = vmax.f32 %v492, %v493
    %v495 = vrot.slane %v494, 1
    %v496 = vmax.f32 %v494, %v495
    %v497 = vsel %vm460, %v422, -inf
    %v498 = vsel %vm460, %v427, -inf
    %v499 = vmax.f32 %v497, %v498
    %v500 = vrot.slane %v499, 4
    %v501 = vmax.f32 %v499, %v500
    %v502 = vrot.slane %v501, 2
    %v503 = vmax.f32 %v501, %v502
    %v504 = vrot.slane %v503, 1
    %v505 = vmax.f32 %v503, %v504
    %v506 = vsel %vm460, %v432, -inf
    %v507 = vsel %vm460, %v437, -inf
    %v508 = vmax.f32 %v506, %v507
    %v509 = vrot.slane %v508, 4
    %v510 = vmax.f32 %v508, %v509
    %v511 = vrot.slane %v510, 2
    %v512 = vmax.f32 %v510, %v511
    %v513 = vrot.slane %v512, 1
    %v514 = vmax.f32 %v512, %v513
    %v515 = vsel %vm460, %v442, -inf
    %v516 = vsel %vm460, %v447, -inf
    %v517 = vmax.f32 %v515, %v516
    %v518 = vrot.slane %v517, 4
    %v519 = vmax.f32 %v517, %v518
    %v520 = vrot.slane %v519, 2
    %v521 = vmax.f32 %v519, %v520
    %v522 = vrot.slane %v521, 1
    %v523 = vmax.f32 %v521, %v522
    %v524 = vsel %vm460, %v452, -inf
    %v525 = vsel %vm460, %v457, -inf
    %v526 = vmax.f32 %v524, %v525
    %v527 = vrot.slane %v526, 4
    %v528 = vmax.f32 %v526, %v527
    %v529 = vrot.slane %v528, 2
    %v530 = vmax.f32 %v528, %v529
    %v531 = vrot.slane %v530, 1
    %v532 = vmax.f32 %v530, %v531
    %v533 = vld [vmem:[%s1] sm:$0xf]
    %v534 = vld [vmem:[%s1 + $0x4] sm:$0xf]
    %v535 = vld [vmem:[%s1 + $0x8] sm:$0xf]
    %v536 = vld [vmem:[%s1 + $0xc] sm:$0xf]
    %v537 = vld [vmem:[%s1 + $0x10] sm:$0xf]
    %v538 = vld [vmem:[%s1 + $0x14] sm:$0xf]
    %v539 = vld [vmem:[%s1 + $0x18] sm:$0xf]
    %v540 = vld [vmem:[%s1 + $0x1c] sm:$0xf]
    %v541 = vld [vmem:[%s1 + $0x20] sm:$0xf]
    %v542 = vld [vmem:[%s1 + $0x24] sm:$0xf]
    %v543 = vld [vmem:[%s1 + $0x28] sm:$0xf]
    %v544 = vld [vmem:[%s1 + $0x2c] sm:$0xf]
    %v545 = vld [vmem:[%s1 + $0x30] sm:$0xf]
    %v546 = vld [vmem:[%s1 + $0x34] sm:$0xf]
    %v547 = vld [vmem:[%s1 + $0x38] sm:$0xf]
    %v548 = vld [vmem:[%s1 + $0x3c] sm:$0xf]
    %v565 = vunpack.c.l.b16 %v533
    %v566 = vunpack.c.l.b16 %v534
    %v567 = vunpack.c.l.b16 %v535
    %v568 = vunpack.c.l.b16 %v536
    %v569 = vunpack.c.l.b16 %v537
    %v570 = vunpack.c.l.b16 %v538
    %v571 = vunpack.c.l.b16 %v539
    %v572 = vunpack.c.l.b16 %v540
    %v573 = vunpack.c.l.b16 %v541
    %v574 = vunpack.c.l.b16 %v542
    %v575 = vunpack.c.l.b16 %v543
    %v576 = vunpack.c.l.b16 %v544
    %v577 = vunpack.c.l.b16 %v545
    %v578 = vunpack.c.l.b16 %v546
    %v579 = vunpack.c.l.b16 %v547
    %v580 = vunpack.c.l.b16 %v548
    %v581 = vpack.c.b16 %v566, %v565
    %v582 = vpack.c.b16 %v568, %v567
    %v583 = vpack.c.b16 %v570, %v569
    %v584 = vpack.c.b16 %v572, %v571
    %v585 = vpack.c.b16 %v574, %v573
    %v586 = vpack.c.b16 %v576, %v575
    %v587 = vpack.c.b16 %v578, %v577
    %v588 = vpack.c.b16 %v580, %v579
    %v590 = vsel %vm109, %v581, 0
    %v593 = vsel %vm109, %v582, 0
    %v596 = vsel %vm109, %v583, 0
    %v599 = vsel %vm109, %v584, 0
    %v602 = vsel %vm109, %v585, 0
    %v605 = vsel %vm109, %v586, 0
    %v608 = vsel %vm109, %v587, 0
    %v611 = vsel %vm109, %v588, 0
    %613 = vmatprep.subr.bf16.mxu0 0
    %614 = vmatpush1.bf16.msra.mxu0 %v106
    %615 = vmatprep.subr.bf16.mxu0 0
    %616 = vmatpush1.bf16.msra.mxu0 %v136
    %617 = vmatprep.subr.bf16.mxu0 0
    %618 = vmatpush1.bf16.msra.mxu0 0
    %619 = vmatprep.subr.bf16.mxu0 0
    %620 = vmatpush1.bf16.msra.mxu0 0
    %621 = vmatprep.subr.bf16.mxu0 0
    %622 = vmatpush1.bf16.msra.mxu0 0
    %623 = vmatprep.subr.bf16.mxu0 0
    %624 = vmatpush1.bf16.msra.mxu0 0
    %625 = vmatprep.subr.bf16.mxu0 0
    %626 = vmatpush1.bf16.msra.mxu0 0
    %627 = vmatprep.subr.bf16.mxu0 0
    %628 = vmatpush1.bf16.msra.mxu0 0
    %629 = vmatprep.subr.bf16.mxu0 0
    %630 = vmatpush1.bf16.msra.mxu0 0
    %631 = vmatprep.subr.bf16.mxu0 0
    %632 = vmatpush1.bf16.msra.mxu0 0
    %633 = vmatprep.subr.bf16.mxu0 0
    %634 = vmatpush1.bf16.msra.mxu0 0
    %635 = vmatprep.subr.bf16.mxu0 0
    %636 = vmatpush1.bf16.msra.mxu0 0
    %637 = vmatprep.subr.bf16.mxu0 0
    %638 = vmatpush1.bf16.msra.mxu0 0
    %639 = vmatprep.subr.bf16.mxu0 0
    %640 = vmatpush1.bf16.msra.mxu0 0
    %641 = vmatprep.subr.bf16.mxu0 0
    %642 = vmatpush1.bf16.msra.mxu0 0
    %643 = vmatprep.subr.bf16.mxu0 0
    %644 = vmatpush1.bf16.msra.mxu0 0
    %645 = vmatprep.mubr.bf16.mxu0 0
    %646 = vmatmul.mubr.bf16.gmra.mrb[0].mxu0 %v590
    %v647 = vpop.f32.mrb[0].mxu0
    %v648 = vadd.f32 %v58, %v647
    %v649 = vpop.f32.mrb[0].mxu0
    %v650 = vpop.f32.mrb[0].mxu0
    %v651 = vadd.f32 %v58, %v650
    %v652 = vpop.f32.mrb[0].mxu0
    %653 = vmatprep.mubr.bf16.mxu0 0
    %654 = vmatmul.mubr.bf16.gmra.mrb[0].mxu0 %v593
    %v655 = vpop.f32.mrb[0].mxu0
    %v656 = vadd.f32 %v58, %v655
    %v657 = vpop.f32.mrb[0].mxu0
    %v658 = vpop.f32.mrb[0].mxu0
    %v659 = vadd.f32 %v58, %v658
    %v660 = vpop.f32.mrb[0].mxu0
    %661 = vmatprep.mubr.bf16.mxu0 0
    %662 = vmatmul.mubr.bf16.gmra.mrb[0].mxu0 %v596
    %v663 = vpop.f32.mrb[0].mxu0
    %v664 = vadd.f32 %v58, %v663
    %v665 = vpop.f32.mrb[0].mxu0
    %v666 = vpop.f32.mrb[0].mxu0
    %v667 = vadd.f32 %v58, %v666
    %v668 = vpop.f32.mrb[0].mxu0
    %669 = vmatprep.mubr.bf16.mxu0 0
    %670 = vmatmul.mubr.bf16.gmra.mrb[0].mxu0 %v599
    %v671 = vpop.f32.mrb[0].mxu0
    %v672 = vadd.f32 %v58, %v671
    %v673 = vpop.f32.mrb[0].mxu0
    %v674 = vpop.f32.mrb[0].mxu0
    %v675 = vadd.f32 %v58, %v674
    %v676 = vpop.f32.mrb[0].mxu0
    %677 = vmatprep.mubr.bf16.mxu0 0
    %678 = vmatmul.mubr.bf16.gmra.mrb[0].mxu0 %v602
    %v679 = vpop.f32.mrb[0].mxu0
    %v680 = vadd.f32 %v58, %v679
    %v681 = vpop.f32.mrb[0].mxu0
    %v682 = vpop.f32.mrb[0].mxu0
    %v683 = vadd.f32 %v58, %v682
    %v684 = vpop.f32.mrb[0].mxu0
    %685 = vmatprep.mubr.bf16.mxu0 0
    %686 = vmatmul.mubr.bf16.gmra.mrb[0].mxu0 %v605
    %v687 = vpop.f32.mrb[0].mxu0
    %v688 = vadd.f32 %v58, %v687
    %v689 = vpop.f32.mrb[0].mxu0
    %v690 = vpop.f32.mrb[0].mxu0
    %v691 = vadd.f32 %v58, %v690
    %v692 = vpop.f32.mrb[0].mxu0
    %693 = vmatprep.mubr.bf16.mxu0 0
    %694 = vmatmul.mubr.bf16.gmra.mrb[0].mxu0 %v608
    %v695 = vpop.f32.mrb[0].mxu0
    %v696 = vadd.f32 %v58, %v695
    %v697 = vpop.f32.mrb[0].mxu0
    %v698 = vpop.f32.mrb[0].mxu0
    %v699 = vadd.f32 %v58, %v698
    %v700 = vpop.f32.mrb[0].mxu0
    %701 = vmatprep.mubr.bf16.mxu0 0
    %702 = vmatmul.mubr.bf16.gmra.mrb[0].mxu0 %v611
    %v703 = vpop.f32.mrb[0].mxu0
    %v704 = vadd.f32 %v58, %v703
    %v705 = vpop.f32.mrb[0].mxu0
    %v706 = vpop.f32.mrb[0].mxu0
    %v707 = vadd.f32 %v58, %v706
    %v708 = vpop.f32.mrb[0].mxu0
    %709 = vdwg.mxu0
    %v710 = vmax.f32 %v648, 0.0
    %v711 = vmax.f32 %v651, 0.0
    %v712 = vmax.f32 %v656, 0.0
    %v713 = vmax.f32 %v659, 0.0
    %v714 = vmax.f32 %v664, 0.0
    %v715 = vmax.f32 %v667, 0.0
    %v716 = vmax.f32 %v672, 0.0
    %v717 = vmax.f32 %v675, 0.0
    %v718 = vmax.f32 %v680, 0.0
    %v719 = vmax.f32 %v683, 0.0
    %v720 = vmax.f32 %v688, 0.0
    %v721 = vmax.f32 %v691, 0.0
    %v722 = vmax.f32 %v696, 0.0
    %v723 = vmax.f32 %v699, 0.0
    %v724 = vmax.f32 %v704, 0.0
    %v725 = vmax.f32 %v707, 0.0
    %v727 = vsel %vm266, %v710, 0
    %v730 = vsel %vm266, %v711, 0
    %v733 = vsel %vm266, %v712, 0
    %v736 = vsel %vm266, %v713, 0
    %v739 = vsel %vm266, %v714, 0
    %v742 = vsel %vm266, %v715, 0
    %v745 = vsel %vm266, %v716, 0
    %v748 = vsel %vm266, %v717, 0
    %v751 = vsel %vm266, %v718, 0
    %v754 = vsel %vm266, %v719, 0
    %v757 = vsel %vm266, %v720, 0
    %v760 = vsel %vm266, %v721, 0
    %v763 = vsel %vm266, %v722, 0
    %v766 = vsel %vm266, %v723, 0
    %v769 = vsel %vm266, %v724, 0
    %v772 = vsel %vm266, %v725, 0
    %774 = vmatprep.subr.mxu0 0.0
    %775 = vmatpush1.msra.mxu0 %v251
    %776 = vmatprep.subr.mxu0 0.0
    %777 = vmatpush1.msra.mxu0 %v252
    %778 = vmatprep.subr.mxu0 0.0
    %779 = vmatpush1.msra.mxu0 %v253
    %780 = vmatprep.subr.mxu0 0.0
    %781 = vmatpush1.msra.mxu0 %v254
    %782 = vmatprep.subr.mxu0 0.0
    %783 = vmatpush1.msra.mxu0 %v255
    %784 = vmatprep.subr.mxu0 0.0
    %785 = vmatpush1.msra.mxu0 %v256
    %786 = vmatprep.subr.mxu0 0.0
    %787 = vmatpush1.msra.mxu0 %v257
    %788 = vmatprep.subr.mxu0 0.0
    %789 = vmatpush1.msra.mxu0 %v258
    %790 = vmatprep.subr.mxu0 0.0
    %791 = vmatpush1.msra.mxu0 0.0
    %792 = vmatprep.subr.mxu0 0.0
    %793 = vmatpush1.msra.mxu0 0.0
    %794 = vmatprep.subr.mxu0 0.0
    %795 = vmatpush1.msra.mxu0 0.0
    %796 = vmatprep.subr.mxu0 0.0
    %797 = vmatpush1.msra.mxu0 0.0
    %798 = vmatprep.subr.mxu0 0.0
    %799 = vmatpush1.msra.mxu0 0.0
    %800 = vmatprep.subr.mxu0 0.0
    %801 = vmatpush1.msra.mxu0 0.0
    %802 = vmatprep.subr.mxu0 0.0
    %803 = vmatpush1.msra.mxu0 0.0
    %804 = vmatprep.subr.mxu0 0.0
    %805 = vmatpush1.msra.mxu0 0.0
    %806 = vmatprep.subr.mxu0 0.0
    %807 = vmatpush1.msra.mxu0 0.0
    %808 = vmatprep.subr.mxu0 0.0
    %809 = vmatpush1.msra.mxu0 0.0
    %810 = vmatprep.subr.mxu0 0.0
    %811 = vmatpush1.msra.mxu0 0.0
    %812 = vmatprep.subr.mxu0 0.0
    %813 = vmatpush1.msra.mxu0 0.0
    %814 = vmatprep.subr.mxu0 0.0
    %815 = vmatpush1.msra.mxu0 0.0
    %816 = vmatprep.subr.mxu0 0.0
    %817 = vmatpush1.msra.mxu0 0.0
    %818 = vmatprep.subr.mxu0 0.0
    %819 = vmatpush1.msra.mxu0 0.0
    %820 = vmatprep.subr.mxu0 0.0
    %821 = vmatpush1.msra.mxu0 0.0
    %822 = vmatprep.subr.mxu0 0.0
    %823 = vmatpush1.msra.mxu0 0.0
    %824 = vmatprep.subr.mxu0 0.0
    %825 = vmatpush1.msra.mxu0 0.0
    %826 = vmatprep.subr.mxu0 0.0
    %827 = vmatpush1.msra.mxu0 0.0
    %828 = vmatprep.subr.mxu0 0.0
    %829 = vmatpush1.msra.mxu0 0.0
    %830 = vmatprep.subr.mxu0 0.0
    %831 = vmatpush1.msra.mxu0 0.0
    %832 = vmatprep.subr.mxu0 0.0
    %833 = vmatpush1.msra.mxu0 0.0
    %834 = vmatprep.subr.mxu0 0.0
    %835 = vmatpush1.msra.mxu0 0.0
    %836 = vmatprep.subr.mxu0 0.0
    %837 = vmatpush1.msra.mxu0 0.0
    %838 = vmatprep.mubr.f32.mxu0 0.0
    %839 = vmatmul.mubr.f32.gmra.mrb[0].mxu0 %v727
    %v840 = vpop.f32.mrb[0].mxu0
    %v841 = vadd.f32 %v264, %v840
    %v842 = vpop.f32.mrb[0].mxu0
    %843 = vmatprep.mubr.f32.mxu0 0.0
    %844 = vmatmul.mubr.f32.gmra.mrb[0].mxu0 %v730
    %v845 = vpop.f32.mrb[0].mxu0
    %v846 = vadd.f32 %v264, %v845
    %v847 = vpop.f32.mrb[0].mxu0
    %848 = vmatprep.mubr.f32.mxu0 0.0
    %849 = vmatmul.mubr.f32.gmra.mrb[0].mxu0 %v733
    %v850 = vpop.f32.mrb[0].mxu0
    %v851 = vadd.f32 %v264, %v850
    %v852 = vpop.f32.mrb[0].mxu0
    %853 = vmatprep.mubr.f32.mxu0 0.0
    %854 = vmatmul.mubr.f32.gmra.mrb[0].mxu0 %v736
    %v855 = vpop.f32.mrb[0].mxu0
    %v856 = vadd.f32 %v264, %v855
    %v857 = vpop.f32.mrb[0].mxu0
    %858 = vmatprep.mubr.f32.mxu0 0.0
    %859 = vmatmul.mubr.f32.gmra.mrb[0].mxu0 %v739
    %v860 = vpop.f32.mrb[0].mxu0
    %v861 = vadd.f32 %v264, %v860
    %v862 = vpop.f32.mrb[0].mxu0
    %863 = vmatprep.mubr.f32.mxu0 0.0
    %864 = vmatmul.mubr.f32.gmra.mrb[0].mxu0 %v742
    %v865 = vpop.f32.mrb[0].mxu0
    %v866 = vadd.f32 %v264, %v865
    %v867 = vpop.f32.mrb[0].mxu0
    %868 = vmatprep.mubr.f32.mxu0 0.0
    %869 = vmatmul.mubr.f32.gmra.mrb[0].mxu0 %v745
    %v870 = vpop.f32.mrb[0].mxu0
    %v871 = vadd.f32 %v264, %v870
    %v872 = vpop.f32.mrb[0].mxu0
    %873 = vmatprep.mubr.f32.mxu0 0.0
    %874 = vmatmul.mubr.f32.gmra.mrb[0].mxu0 %v748
    %v875 = vpop.f32.mrb[0].mxu0
    %v876 = vadd.f32 %v264, %v875
    %v877 = vpop.f32.mrb[0].mxu0
    %878 = vmatprep.mubr.f32.mxu0 0.0
    %879 = vmatmul.mubr.f32.gmra.mrb[0].mxu0 %v751
    %v880 = vpop.f32.mrb[0].mxu0
    %v881 = vadd.f32 %v264, %v880
    %v882 = vpop.f32.mrb[0].mxu0
    %883 = vmatprep.mubr.f32.mxu0 0.0
    %884 = vmatmul.mubr.f32.gmra.mrb[0].mxu0 %v754
    %v885 = vpop.f32.mrb[0].mxu0
    %v886 = vadd.f32 %v264, %v885
    %v887 = vpop.f32.mrb[0].mxu0
    %888 = vmatprep.mubr.f32.mxu0 0.0
    %889 = vmatmul.mubr.f32.gmra.mrb[0].mxu0 %v757
    %v890 = vpop.f32.mrb[0].mxu0
    %v891 = vadd.f32 %v264, %v890
    %v892 = vpop.f32.mrb[0].mxu0
    %893 = vmatprep.mubr.f32.mxu0 0.0
    %894 = vmatmul.mubr.f32.gmra.mrb[0].mxu0 %v760
    %v895 = vpop.f32.mrb[0].mxu0
    %v896 = vadd.f32 %v264, %v895
    %v897 = vpop.f32.mrb[0].mxu0
    %898 = vmatprep.mubr.f32.mxu0 0.0
    %899 = vmatmul.mubr.f32.gmra.mrb[0].mxu0 %v763
    %v900 = vpop.f32.mrb[0].mxu0
    %v901 = vadd.f32 %v264, %v900
    %v902 = vpop.f32.mrb[0].mxu0
    %903 = vmatprep.mubr.f32.mxu0 0.0
    %904 = vmatmul.mubr.f32.gmra.mrb[0].mxu0 %v766
    %v905 = vpop.f32.mrb[0].mxu0
    %v906 = vadd.f32 %v264, %v905
    %v907 = vpop.f32.mrb[0].mxu0
    %908 = vmatprep.mubr.f32.mxu0 0.0
    %909 = vmatmul.mubr.f32.gmra.mrb[0].mxu0 %v769
    %v910 = vpop.f32.mrb[0].mxu0
    %v911 = vadd.f32 %v264, %v910
    %v912 = vpop.f32.mrb[0].mxu0
    %913 = vmatprep.mubr.f32.mxu0 0.0
    %914 = vmatmul.mubr.f32.gmra.mrb[0].mxu0 %v772
    %v915 = vpop.f32.mrb[0].mxu0
    %v916 = vadd.f32 %v264, %v915
    %v917 = vpop.f32.mrb[0].mxu0
    %918 = vdwg.mxu0
    %v919 = vsel %vm460, %v841, -inf
    %v920 = vsel %vm460, %v846, -inf
    %v921 = vmax.f32 %v919, %v920
    %v922 = vrot.slane %v921, 4
    %v923 = vmax.f32 %v921, %v922
    %v924 = vrot.slane %v923, 2
    %v925 = vmax.f32 %v923, %v924
    %v926 = vrot.slane %v925, 1
    %v927 = vmax.f32 %v925, %v926
    %v928 = vsel %vm460, %v851, -inf
    %v929 = vsel %vm460, %v856, -inf
    %v930 = vmax.f32 %v928, %v929
    %v931 = vrot.slane %v930, 4
    %v932 = vmax.f32 %v930, %v931
    %v933 = vrot.slane %v932, 2
    %v934 = vmax.f32 %v932, %v933
    %v935 = vrot.slane %v934, 1
    %v936 = vmax.f32 %v934, %v935
    %v937 = vsel %vm460, %v861, -inf
    %v938 = vsel %vm460, %v866, -inf
    %v939 = vmax.f32 %v937, %v938
    %v940 = vrot.slane %v939, 4
    %v941 = vmax.f32 %v939, %v940
    %v942 = vrot.slane %v941, 2
    %v943 = vmax.f32 %v941, %v942
    %v944 = vrot.slane %v943, 1
    %v945 = vmax.f32 %v943, %v944
    %v946 = vsel %vm460, %v871, -inf
    %v947 = vsel %vm460, %v876, -inf
    %v948 = vmax.f32 %v946, %v947
    %v949 = vrot.slane %v948, 4
    %v950 = vmax.f32 %v948, %v949
    %v951 = vrot.slane %v950, 2
    %v952 = vmax.f32 %v950, %v951
    %v953 = vrot.slane %v952, 1
    %v954 = vmax.f32 %v952, %v953
    %v955 = vsel %vm460, %v881, -inf
    %v956 = vsel %vm460, %v886, -inf
    %v957 = vmax.f32 %v955, %v956
    %v958 = vrot.slane %v957, 4
    %v959 = vmax.f32 %v957, %v958
    %v960 = vrot.slane %v959, 2
    %v961 = vmax.f32 %v959, %v960
    %v962 = vrot.slane %v961, 1
    %v963 = vmax.f32 %v961, %v962
    %v964 = vsel %vm460, %v891, -inf
    %v965 = vsel %vm460, %v896, -inf
    %v966 = vmax.f32 %v964, %v965
    %v967 = vrot.slane %v966, 4
    %v968 = vmax.f32 %v966, %v967
    %v969 = vrot.slane %v968, 2
    %v970 = vmax.f32 %v968, %v969
    %v971 = vrot.slane %v970, 1
    %v972 = vmax.f32 %v970, %v971
    %v973 = vsel %vm460, %v901, -inf
    %v974 = vsel %vm460, %v906, -inf
    %v975 = vmax.f32 %v973, %v974
    %v976 = vrot.slane %v975, 4
    %v977 = vmax.f32 %v975, %v976
    %v978 = vrot.slane %v977, 2
    %v979 = vmax.f32 %v977, %v978
    %v980 = vrot.slane %v979, 1
    %v981 = vmax.f32 %v979, %v980
    %v982 = vsel %vm460, %v911, -inf
    %v983 = vsel %vm460, %v916, -inf
    %v984 = vmax.f32 %v982, %v983
    %v985 = vrot.slane %v984, 4
    %v986 = vmax.f32 %v984, %v985
    %v987 = vrot.slane %v986, 2
    %v988 = vmax.f32 %v986, %v987
    %v989 = vrot.slane %v988, 1
    %v990 = vmax.f32 %v988, %v989
    %v991 = vld [vmem:[%s6] sm:$0xff]
    %v992 = vld [vmem:[%s6 + $0x8] sm:$0xff]
    %v993 = vld [vmem:[%s6 + $0x10] sm:$0xff]
    %v994 = vld [vmem:[%s6 + $0x18] sm:$0xff]
    %v995 = vld [vmem:[%s7] sm:$0xff]
    %v996 = vld [vmem:[%s7 + $0x8] sm:$0xff]
    %v997 = vld [vmem:[%s7 + $0x10] sm:$0xff]
    %v998 = vld [vmem:[%s7 + $0x18] sm:$0xff]
    %vm1007 = vcmask 1041409
    %v1008 = vsel %vm1007, %v936, %v927
    %vm1009 = vcmask 1042434
    %v1010 = vsel %vm1009, %v945, %v1008
    %vm1011 = vcmask 1043459
    %v1012 = vsel %vm1011, %v954, %v1010
    %vm1013 = vcmask 1044484
    %v1014 = vsel %vm1013, %v963, %v1012
    %vm1015 = vcmask 1045509
    %v1016 = vsel %vm1015, %v972, %v1014
    %vm1017 = vcmask 1046534
    %v1018 = vsel %vm1017, %v981, %v1016
    %vm1019 = vcmask 1047559
    %v1020 = vsel %vm1019, %v990, %v1018
    %v1021 = vsel %vm460, %v1020, 0
    %1023 = vmatprep.subr.mxu0 0.0
    %1024 = vmatpush1.msra.mxu0 %v995
    %1025 = vmatprep.subr.mxu0 0.0
    %1026 = vmatpush1.msra.mxu0 %v996
    %1027 = vmatprep.subr.mxu0 0.0
    %1028 = vmatpush1.msra.mxu0 %v997
    %1029 = vmatprep.subr.mxu0 0.0
    %1030 = vmatpush1.msra.mxu0 %v998
    %1031 = vmatprep.subr.mxu0 0.0
    %1032 = vmatpush1.msra.mxu0 0.0
    %1033 = vmatprep.subr.mxu0 0.0
    %1034 = vmatpush1.msra.mxu0 0.0
    %1035 = vmatprep.subr.mxu0 0.0
    %1036 = vmatpush1.msra.mxu0 0.0
    %1037 = vmatprep.subr.mxu0 0.0
    %1038 = vmatpush1.msra.mxu0 0.0
    %1039 = vmatprep.subr.mxu0 0.0
    %1040 = vmatpush1.msra.mxu0 0.0
    %1041 = vmatprep.subr.mxu0 0.0
    %1042 = vmatpush1.msra.mxu0 0.0
    %1043 = vmatprep.subr.mxu0 0.0
    %1044 = vmatpush1.msra.mxu0 0.0
    %1045 = vmatprep.subr.mxu0 0.0
    %1046 = vmatpush1.msra.mxu0 0.0
    %1047 = vmatprep.subr.mxu0 0.0
    %1048 = vmatpush1.msra.mxu0 0.0
    %1049 = vmatprep.subr.mxu0 0.0
    %1050 = vmatpush1.msra.mxu0 0.0
    %1051 = vmatprep.subr.mxu0 0.0
    %1052 = vmatpush1.msra.mxu0 0.0
    %1053 = vmatprep.subr.mxu0 0.0
    %1054 = vmatpush1.msra.mxu0 0.0
    %1055 = vmatprep.subr.mxu0 0.0
    %1056 = vmatpush1.msra.mxu0 0.0
    %1057 = vmatprep.subr.mxu0 0.0
    %1058 = vmatpush1.msra.mxu0 0.0
    %1059 = vmatprep.subr.mxu0 0.0
    %1060 = vmatpush1.msra.mxu0 0.0
    %1061 = vmatprep.subr.mxu0 0.0
    %1062 = vmatpush1.msra.mxu0 0.0
    %1063 = vmatprep.subr.mxu0 0.0
    %1064 = vmatpush1.msra.mxu0 0.0
    %1065 = vmatprep.subr.mxu0 0.0
    %1066 = vmatpush1.msra.mxu0 0.0
    %1067 = vmatprep.subr.mxu0 0.0
    %1068 = vmatpush1.msra.mxu0 0.0
    %1069 = vmatprep.subr.mxu0 0.0
    %1070 = vmatpush1.msra.mxu0 0.0
    %1071 = vmatprep.subr.mxu0 0.0
    %1072 = vmatpush1.msra.mxu0 0.0
    %1073 = vmatprep.subr.mxu0 0.0
    %1074 = vmatpush1.msra.mxu0 0.0
    %1075 = vmatprep.subr.mxu0 0.0
    %1076 = vmatpush1.msra.mxu0 0.0
    %1077 = vmatprep.subr.mxu0 0.0
    %1078 = vmatpush1.msra.mxu0 0.0
    %1079 = vmatprep.subr.mxu0 0.0
    %1080 = vmatpush1.msra.mxu0 0.0
    %1081 = vmatprep.subr.mxu0 0.0
    %1082 = vmatpush1.msra.mxu0 0.0
    %1083 = vmatprep.subr.mxu0 0.0
    %1084 = vmatpush1.msra.mxu0 0.0
    %1085 = vmatprep.subr.mxu0 0.0
    %1086 = vmatpush1.msra.mxu0 0.0
    %1087 = vmatprep.mubr.f32.mxu0 0.0
    %1088 = vmatmul.mubr.f32.gmra.mrb[0].mxu0 %v1021
    %v1089 = vpop.f32.mrb[0].mxu0
    %v1090 = vadd.f32 0.0, %v1089
    %v1091 = vpop.f32.mrb[0].mxu0
    %1092 = vdwg.mxu0
    %v1101 = vsel %vm1007, %v478, %v469
    %v1102 = vsel %vm1009, %v487, %v1101
    %v1103 = vsel %vm1011, %v496, %v1102
    %v1104 = vsel %vm1013, %v505, %v1103
    %v1105 = vsel %vm1015, %v514, %v1104
    %v1106 = vsel %vm1017, %v523, %v1105
    %v1107 = vsel %vm1019, %v532, %v1106
    %v1108 = vsel %vm460, %v1107, 0
    %1110 = vmatprep.subr.mxu0 0.0
    %1111 = vmatpush1.msra.mxu0 %v991
    %1112 = vmatprep.subr.mxu0 0.0
    %1113 = vmatpush1.msra.mxu0 %v992
    %1114 = vmatprep.subr.mxu0 0.0
    %1115 = vmatpush1.msra.mxu0 %v993
    %1116 = vmatprep.subr.mxu0 0.0
    %1117 = vmatpush1.msra.mxu0 %v994
    %1118 = vmatprep.subr.mxu0 0.0
    %1119 = vmatpush1.msra.mxu0 0.0
    %1120 = vmatprep.subr.mxu0 0.0
    %1121 = vmatpush1.msra.mxu0 0.0
    %1122 = vmatprep.subr.mxu0 0.0
    %1123 = vmatpush1.msra.mxu0 0.0
    %1124 = vmatprep.subr.mxu0 0.0
    %1125 = vmatpush1.msra.mxu0 0.0
    %1126 = vmatprep.subr.mxu0 0.0
    %1127 = vmatpush1.msra.mxu0 0.0
    %1128 = vmatprep.subr.mxu0 0.0
    %1129 = vmatpush1.msra.mxu0 0.0
    %1130 = vmatprep.subr.mxu0 0.0
    %1131 = vmatpush1.msra.mxu0 0.0
    %1132 = vmatprep.subr.mxu0 0.0
    %1133 = vmatpush1.msra.mxu0 0.0
    %1134 = vmatprep.subr.mxu0 0.0
    %1135 = vmatpush1.msra.mxu0 0.0
    %1136 = vmatprep.subr.mxu0 0.0
    %1137 = vmatpush1.msra.mxu0 0.0
    %1138 = vmatprep.subr.mxu0 0.0
    %1139 = vmatpush1.msra.mxu0 0.0
    %1140 = vmatprep.subr.mxu0 0.0
    %1141 = vmatpush1.msra.mxu0 0.0
    %1142 = vmatprep.subr.mxu0 0.0
    %1143 = vmatpush1.msra.mxu0 0.0
    %1144 = vmatprep.subr.mxu0 0.0
    %1145 = vmatpush1.msra.mxu0 0.0
    %1146 = vmatprep.subr.mxu0 0.0
    %1147 = vmatpush1.msra.mxu0 0.0
    %1148 = vmatprep.subr.mxu0 0.0
    %1149 = vmatpush1.msra.mxu0 0.0
    %1150 = vmatprep.subr.mxu0 0.0
    %1151 = vmatpush1.msra.mxu0 0.0
    %1152 = vmatprep.subr.mxu0 0.0
    %1153 = vmatpush1.msra.mxu0 0.0
    %1154 = vmatprep.subr.mxu0 0.0
    %1155 = vmatpush1.msra.mxu0 0.0
    %1156 = vmatprep.subr.mxu0 0.0
    %1157 = vmatpush1.msra.mxu0 0.0
    %1158 = vmatprep.subr.mxu0 0.0
    %1159 = vmatpush1.msra.mxu0 0.0
    %1160 = vmatprep.subr.mxu0 0.0
    %1161 = vmatpush1.msra.mxu0 0.0
    %1162 = vmatprep.subr.mxu0 0.0
    %1163 = vmatpush1.msra.mxu0 0.0
    %1164 = vmatprep.subr.mxu0 0.0
    %1165 = vmatpush1.msra.mxu0 0.0
    %1166 = vmatprep.subr.mxu0 0.0
    %1167 = vmatpush1.msra.mxu0 0.0
    %1168 = vmatprep.subr.mxu0 0.0
    %1169 = vmatpush1.msra.mxu0 0.0
    %1170 = vmatprep.subr.mxu0 0.0
    %1171 = vmatpush1.msra.mxu0 0.0
    %1172 = vmatprep.subr.mxu0 0.0
    %1173 = vmatpush1.msra.mxu0 0.0
    %1174 = vmatprep.mubr.f32.mxu0 0.0
    %1175 = vmatmul.mubr.f32.gmra.mrb[0].mxu0 %v1108
    %v1176 = vpop.f32.mrb[0].mxu0
    %v1177 = vadd.f32 %v1090, %v1176
    %v1178 = vpop.f32.mrb[0].mxu0
    %1179 = vdwg.mxu0
    %v1180 = vld [vmem:[%s8] sm:$0x1]
    %v1182 = vlaneseq
    %v1183 = vshrl.u32 %v1182, 7
    %v1184 = vsub.s32 0, %v1183
    %v1185 = vrot.slane %v1180, %v1184
    %v1187 = vadd.f32 %v1177, %v1185
    %1188 = vst.msk [vmem:[#allocation2] sm:$0xff] %vm460, %v1187
    // Predicated region
    $region38: #{point_cloud_extractor_forward.1} parent=1 // pred_check
      _
    $region39: #{point_cloud_extractor_forward.1} parent=1 // pred_check_branch
      %1190 = sbr.rel (0) target = $region41
    $region40: #{point_cloud_extractor_forward.1} parent=1 // pred_region
      %s1192 = ssub.s32 128, 128
      %1193 = vsyncadd [#allocation3], %s1192
      %s1195 = sshll.u32 [#allocation2], 4
      %s1196 = int_to_ptr.vmem [resolvable:$true] %s1195
      %1198 = dma.vmem_to_hbm [thread:$0]  %s1196, 128, %s9, [#allocation3]
    $region41: #{point_cloud_extractor_forward.1} parent=1 // pred_fallthru
      _
    // Predicated region
    $region42: #{point_cloud_extractor_forward.1} parent=1 // pred_check
      _
    $region43: #{point_cloud_extractor_forward.1} parent=1 // pred_check_branch
      %1200 = sbr.rel (0) target = $region45
    $region44: #{point_cloud_extractor_forward.1} parent=1 // pred_region
      %1201 = dma.done [#allocation3], 128
    $region45: #{point_cloud_extractor_forward.1} parent=1 // pred_fallthru
      _
    %1202 = vsyncpa [#allocation3], 1

</llo_original>
